<compile_context>
chip_gen: v6e
topology: v6e:2x2x1
jax: 0.10.0
libtpu: 0.0.40
codegen_flags: <defaults>
</compile_context>

<pallas_src>
import functools

import jax
import jax.numpy as jnp
from jax.experimental import pallas as pl
from jax.experimental.pallas import tpu as pltpu


# ---------------------------------------------------------------------------
# Chip / VMEM configuration (generation aware)
# ---------------------------------------------------------------------------
@functools.lru_cache(maxsize=1)
def _chip_config():
    """Returns (vmem_capacity, scoped_vmem_limit, block_budget, tensorcores_per_chip)."""
    cap = None
    n_tc = None
    try:
        info = pltpu.get_tpu_info()
        cap = getattr(info, "vmem_capacity_bytes", None)
        for attr in ("num_tensorcores", "tensorcores_per_chip", "num_cores"):
            v = getattr(info, attr, None)
            if isinstance(v, int) and v > 0:
                n_tc = v
                break
    except Exception:
        pass
    if not cap:
        cap = 64 * 2**20                       # conservative default (v7x per-TC VMEM)
    if not n_tc:
        n_tc = 2 if cap <= 64 * 2**20 else 1   # small per-TC VMEM => v7x-class (2 TCs)
    limit = int(cap * 0.75)                    # ~96 MiB on v5e/v6e, ~48 MiB on v7x
    budget = int(limit * 0.45)                 # double-buffered in+out block budget
    return int(cap), limit, budget, int(n_tc)


def _pick_channel_tile(c, per_ch_bytes, budget_bytes, n_tc, sub):
    """Largest legal channel tile (multiple of `sub` dividing C, or full C) whose
    per-step footprint fits the budget.  On 2-TC chips prefer an even block count."""
    cands = sorted({t for t in range(sub, c + 1, sub) if c % t == 0} | {c})
    fitting = [t for t in cands if t * per_ch_bytes <= budget_bytes]
    if not fitting:
        # TODO(synk): for huge per-channel volumes a two-pass (stats then normalize)
        # variant with spatial (H*W) tiling would keep blocks in the roofline sweet
        # spot instead of raising the VMEM limit for one oversized block.
        return cands[0]
    if n_tc <= 1:
        return max(fitting)                    # single TC: fewest, largest grid steps
    even = [t for t in fitting if (c // t) >= 2 and (c // t) % 2 == 0]
    if even:
        return max(even)                       # 2 TCs: balanced, even block count
    multi = [t for t in fitting if (c // t) >= 2]
    return max(multi) if multi else max(fitting)


# ---------------------------------------------------------------------------
# Kernels (block: x (N, ct, HW) in native dtype; per-channel params (ct, 1) f32)
# ---------------------------------------------------------------------------
def _bn_train_kernel(x_ref, w_ref, b_ref, y_ref, mean_ref, var_ref, *, eps, inv_n):
    x = x_ref[...].astype(jnp.float32)                                 # (N, ct, HW)
    s1 = jnp.sum(jnp.sum(x, axis=0), axis=-1, keepdims=True)           # (ct, 1)
    s2 = jnp.sum(jnp.sum(x * x, axis=0), axis=-1, keepdims=True)       # (ct, 1)
    mean = s1 * inv_n
    var = jnp.maximum(s2 * inv_n - mean * mean, 0.0)   # single pass; clamp cancellation
    scale = jax.lax.rsqrt(var + eps) * w_ref[...]
    shift = b_ref[...] - mean * scale
    y_ref[...] = (x * scale + shift).astype(y_ref.dtype)
    mean_ref[...] = mean
    var_ref[...] = var


def _bn_eval_kernel(x_ref, scale_ref, shift_ref, y_ref):
    y_ref[...] = (x_ref[...].astype(jnp.float32) * scale_ref[...]
                  + shift_ref[...]).astype(y_ref.dtype)


# ---------------------------------------------------------------------------
# pallas_call wrapper (grid over channel tiles only; x viewed as (N, C, H*W))
# ---------------------------------------------------------------------------
def _channel_grid_call(kernel, x3, chan_args, n_stat_outputs):
    N, C, HW = x3.shape
    itemsize = jnp.dtype(x3.dtype).itemsize
    # Per-channel VMEM footprint: 2x double-buffered input + 2x double-buffered output
    # blocks in the native dtype, plus ~2 block-sized f32 temporaries inside the kernel
    # (the f32 upcast / fused elementwise results).
    per_ch = N * HW * (4 * itemsize + 8)
    cap, limit, budget, n_tc = _chip_config()
    sub = 8 * max(1, 4 // itemsize)            # sublane multiple: 8 f32, 16 bf16
    ct = _pick_channel_tile(C, per_ch, budget, n_tc, sub)

    need = ct * per_ch + (2 << 20)             # + params/stats/internal-scratch headroom
    vmem_limit = limit if need <= limit else int(min(need, cap * 0.85))

    x_spec = pl.BlockSpec((N, ct, HW), lambda j: (0, j, 0))
    p_spec = pl.BlockSpec((ct, 1), lambda j: (j, 0))

    out_shape = [jax.ShapeDtypeStruct((N, C, HW), x3.dtype)]
    out_specs = [x_spec]
    for _ in range(n_stat_outputs):
        out_shape.append(jax.ShapeDtypeStruct((C, 1), jnp.float32))
        out_specs.append(p_spec)

    return pl.pallas_call(
        kernel,
        grid=(C // ct,),
        in_specs=[x_spec] + [p_spec] * len(chan_args),
        out_specs=tuple(out_specs),
        out_shape=tuple(out_shape),
        compiler_params=pltpu.CompilerParams(
            dimension_semantics=("parallel",),
            vmem_limit_bytes=int(vmem_limit)),
    )(x3, *chan_args)


# ---------------------------------------------------------------------------
# Functional forward matching MetaBatchNorm2d.forward
# ---------------------------------------------------------------------------
def meta_batchnorm2d(x, weight, bias, running_mean=None, running_var=None, *,
                     training=True, momentum=0.1, eps=1e-5):
    """Returns (y, new_running_mean, new_running_var).

    training=True  -> normalize with batch stats (module default, self.training=True)
    training=False -> normalize with running stats (eval mode)
    """
    N, C, H, W = x.shape
    HW = H * W
    w_f = weight.astype(jnp.float32)
    b_f = bias.astype(jnp.float32)
    use_pallas = HW >= 128      # lane-dense layout; tiny spatial layers -> fused XLA

    if training:
        if use_pallas:
            x3 = x.reshape(N, C, HW)           # free view: no copy, no dtype change
            y3, bmean, bvar = _channel_grid_call(
                functools.partial(_bn_train_kernel, eps=float(eps),
                                  inv_n=1.0 / float(N * HW)),
                x3, (w_f.reshape(C, 1), b_f.reshape(C, 1)), 2)
            y = y3.reshape(N, C, H, W)
            bmean = bmean.reshape(C)
            bvar = bvar.reshape(C)
        else:
            xf = x.astype(jnp.float32)
            bmean = jnp.mean(xf, axis=(0, 2, 3))
            bvar = jnp.mean(jnp.square(xf - bmean[None, :, None, None]), axis=(0, 2, 3))
            scale = jax.lax.rsqrt(bvar + eps) * w_f
            shift = b_f - bmean * scale
            y = (xf * scale[None, :, None, None]
                 + shift[None, :, None, None]).astype(x.dtype)

        if running_mean is None or running_var is None:
            return y, bmean, bvar
        n = N * HW
        unbiased = bvar * (n / max(n - 1, 1))  # torch stores unbiased var in the buffer
        new_rm = ((1.0 - momentum) * running_mean.astype(jnp.float32)
                  + momentum * bmean).astype(running_mean.dtype)
        new_rv = ((1.0 - momentum) * running_var.astype(jnp.float32)
                  + momentum * unbiased).astype(running_var.dtype)
        return y, new_rm, new_rv
    else:
        rm = running_mean.astype(jnp.float32)
        rv = running_var.astype(jnp.float32)
        scale = w_f * jax.lax.rsqrt(rv + eps)  # fold BN into per-channel affine
        shift = b_f - rm * scale
        if use_pallas:
            x3 = x.reshape(N, C, HW)
            (y3,) = _channel_grid_call(
                _bn_eval_kernel, x3, (scale.reshape(C, 1), shift.reshape(C, 1)), 0)
            y = y3.reshape(N, C, H, W)
        else:
            y = (x.astype(jnp.float32) * scale[None, :, None, None]
                 + shift[None, :, None, None]).astype(x.dtype)
        return y, running_mean, running_var


# ---------------------------------------------------------------------------
# Pure-JAX reference (F.batch_norm semantics) for correctness spot-checks
# ---------------------------------------------------------------------------
def _reference(x, weight, bias, running_mean, running_var, training, eps):
    xf = x.astype(jnp.float32)
    if training:
        mean = jnp.mean(xf, axis=(0, 2, 3))
        var = jnp.mean((xf - mean[None, :, None, None]) ** 2, axis=(0, 2, 3))
    else:
        mean = running_mean.astype(jnp.float32)
        var = running_var.astype(jnp.float32)
    inv = jax.lax.rsqrt(var + eps)
    return ((xf - mean[None, :, None, None]) * (inv * weight)[None, :, None, None]
            + bias[None, :, None, None]).astype(x.dtype)


if __name__ == "__main__":
    key = jax.random.PRNGKey(0)
    kx, kw, kb, km, kv = jax.random.split(key, 5)
    # Small shapes: batch=2, channels=16, 16x16 spatial (HW=256 -> lane-dense path).
    N, C, H, W = 2, 16, 16, 16
    x = jax.random.normal(kx, (N, C, H, W), jnp.float32)
    weight = 1.0 + 0.1 * jax.random.normal(kw, (C,), jnp.float32)
    bias = 0.1 * jax.random.normal(kb, (C,), jnp.float32)
    running_mean = 0.1 * jax.random.normal(km, (C,), jnp.float32)
    running_var = 1.0 + jax.random.uniform(kv, (C,), jnp.float32)

    train_fn = jax.jit(functools.partial(meta_batchnorm2d, training=True))
    eval_fn = jax.jit(functools.partial(meta_batchnorm2d, training=False))

    y_tr, new_rm, new_rv = train_fn(x, weight, bias, running_mean, running_var)
    y_ev, _, _ = eval_fn(x, weight, bias, running_mean, running_var)
    jax.block_until_ready((y_tr, new_rm, new_rv, y_ev))

    # Forward outputs vs. reference (training and eval paths).
    y_tr_ref = _reference(x, weight, bias, running_mean, running_var, True, 1e-5)
    y_ev_ref = _reference(x, weight, bias, running_mean, running_var, False, 1e-5)
    assert y_tr.shape == (N, C, H, W) and y_tr.dtype == x.dtype
    assert jnp.allclose(y_tr, y_tr_ref, atol=1e-4, rtol=1e-4)
    assert jnp.allclose(y_ev, y_ev_ref, atol=1e-4, rtol=1e-4)

    # Running-stat momentum update (functional equivalent of the in-place buffer update).
    bmean_ref = jnp.mean(x, axis=(0, 2, 3))
    bvar_ref = jnp.var(x, axis=(0, 2, 3))
    n_el = N * H * W
    rm_ref = 0.9 * running_mean + 0.1 * bmean_ref
    rv_ref = 0.9 * running_var + 0.1 * bvar_ref * (n_el / (n_el - 1))
    assert jnp.allclose(new_rm, rm_ref, atol=1e-4, rtol=1e-4)
    assert jnp.allclose(new_rv, rv_ref, atol=1e-4, rtol=1e-4)

    # bf16 activation path: native-dtype I/O (bf16 in, bf16 out, f32 math inside).
    xb = x.astype(jnp.bfloat16)
    yb, _, _ = train_fn(xb, weight, bias, running_mean, running_var)
    jax.block_until_ready(yb)
    yb_ref = _reference(xb, weight, bias, running_mean, running_var, True, 1e-5)
    assert yb.dtype == jnp.bfloat16
    assert jnp.allclose(yb.astype(jnp.float32), yb_ref.astype(jnp.float32),
                        atol=3e-2, rtol=3e-2)

    # Small-spatial (H*W < 128) fused-XLA fallback path (late VGG layers).
    xs = jax.random.normal(kx, (2, 16, 4, 4), jnp.float32)
    ys, _, _ = train_fn(xs, weight, bias, running_mean, running_var)
    jax.block_until_ready(ys)
    ys_ref = _reference(xs, weight, bias, running_mean, running_var, True, 1e-5)
    assert jnp.allclose(ys, ys_ref, atol=1e-4, rtol=1e-4)

    print("KERNEL_OK")
</pallas_src>

<mosaic_0001>
module attributes {stable_mosaic.version = 11 : i64} {
  func.func @_bn_train_kernel(%arg0: i32, %arg1: memref<2x8x256xf32, #tpu.memory_space<vmem>>, %arg2: memref<8x1xf32, #tpu.memory_space<vmem>>, %arg3: memref<8x1xf32, #tpu.memory_space<vmem>>, %arg4: memref<2x8x256xf32, #tpu.memory_space<vmem>>, %arg5: memref<8x1xf32, #tpu.memory_space<vmem>>, %arg6: memref<8x1xf32, #tpu.memory_space<vmem>>) attributes {dimension_semantics = [#tpu.dimension_semantics<parallel>], iteration_bounds = array<i64: 2>, scalar_prefetch = 0 : i64, scratch_operands = 0 : i64, tpu.core_type = #tpu.core_type<tc>, window_params = [{transform_indices = @transform_0, window_bounds = array<i64: 2, 8, 256>}, {transform_indices = @transform_1, window_bounds = array<i64: 8, 1>}, {transform_indices = @transform_2, window_bounds = array<i64: 8, 1>}, {transform_indices = @transform_3, window_bounds = array<i64: 2, 8, 256>}, {transform_indices = @transform_4, window_bounds = array<i64: 8, 1>}, {transform_indices = @transform_5, window_bounds = array<i64: 8, 1>}]} {
    %c0 = arith.constant 0 : index
    %c0_0 = arith.constant 0 : index
    %c0_1 = arith.constant 0 : index
    %0 = vector.load %arg1[%c0, %c0_0, %c0_1] : memref<2x8x256xf32, #tpu.memory_space<vmem>>, vector<2x8x256xf32>
    %cst = arith.constant dense<0.000000e+00> : vector<8x256xf32>
    %1 = vector.multi_reduction <add>, %0, %cst [0] : vector<2x8x256xf32> to vector<8x256xf32>
    %cst_2 = arith.constant dense<0.000000e+00> : vector<8xf32>
    %2 = vector.multi_reduction <add>, %1, %cst_2 [1] : vector<8x256xf32> to vector<8xf32>
    %3 = vector.shape_cast %2 : vector<8xf32> to vector<8x1xf32>
    %4 = arith.mulf %0, %0 : vector<2x8x256xf32>
    %cst_3 = arith.constant dense<0.000000e+00> : vector<8x256xf32>
    %5 = vector.multi_reduction <add>, %4, %cst_3 [0] : vector<2x8x256xf32> to vector<8x256xf32>
    %cst_4 = arith.constant dense<0.000000e+00> : vector<8xf32>
    %6 = vector.multi_reduction <add>, %5, %cst_4 [1] : vector<8x256xf32> to vector<8xf32>
    %7 = vector.shape_cast %6 : vector<8xf32> to vector<8x1xf32>
    %cst_5 = arith.constant 0.001953125 : f32
    %8 = vector.broadcast %cst_5 : f32 to vector<8x1xf32>
    %9 = arith.mulf %3, %8 : vector<8x1xf32>
    %cst_6 = arith.constant 0.001953125 : f32
    %10 = vector.broadcast %cst_6 : f32 to vector<8x1xf32>
    %11 = arith.mulf %7, %10 : vector<8x1xf32>
    %12 = arith.mulf %9, %9 : vector<8x1xf32>
    %13 = arith.subf %11, %12 : vector<8x1xf32>
    %cst_7 = arith.constant 0.000000e+00 : f32
    %14 = vector.broadcast %cst_7 : f32 to vector<8x1xf32>
    %15 = arith.maximumf %13, %14 : vector<8x1xf32>
    %cst_8 = arith.constant 9.99999974E-6 : f32
    %16 = vector.broadcast %cst_8 : f32 to vector<8x1xf32>
    %17 = arith.addf %15, %16 : vector<8x1xf32>
    %18 = math.rsqrt %17 : vector<8x1xf32>
    %c0_9 = arith.constant 0 : index
    %c0_10 = arith.constant 0 : index
    %19 = vector.load %arg2[%c0_9, %c0_10] : memref<8x1xf32, #tpu.memory_space<vmem>>, vector<8x1xf32>
    %20 = arith.mulf %18, %19 : vector<8x1xf32>
    %c0_11 = arith.constant 0 : index
    %c0_12 = arith.constant 0 : index
    %21 = vector.load %arg3[%c0_11, %c0_12] : memref<8x1xf32, #tpu.memory_space<vmem>>, vector<8x1xf32>
    %22 = arith.mulf %9, %20 : vector<8x1xf32>
    %23 = arith.subf %21, %22 : vector<8x1xf32>
    %24 = vector.shape_cast %20 : vector<8x1xf32> to vector<1x8x1xf32>
    %25 = vector.broadcast %24 : vector<1x8x1xf32> to vector<2x8x256xf32>
    %26 = arith.mulf %0, %25 : vector<2x8x256xf32>
    %27 = vector.shape_cast %23 : vector<8x1xf32> to vector<1x8x1xf32>
    %28 = vector.broadcast %27 : vector<1x8x1xf32> to vector<2x8x256xf32>
    %29 = arith.addf %26, %28 : vector<2x8x256xf32>
    %c0_13 = arith.constant 0 : index
    %c0_14 = arith.constant 0 : index
    %c0_15 = arith.constant 0 : index
    %30 = vector.load %arg4[%c0_13, %c0_14, %c0_15] : memref<2x8x256xf32, #tpu.memory_space<vmem>>, vector<2x8x256xf32>
    tpu.vector_store %arg4[%c0_13, %c0_14, %c0_15], %29 {strides = array<i32>} : memref<2x8x256xf32, #tpu.memory_space<vmem>>, vector<2x8x256xf32>,
    %c0_16 = arith.constant 0 : index
    %c0_17 = arith.constant 0 : index
    %31 = vector.load %arg5[%c0_16, %c0_17] : memref<8x1xf32, #tpu.memory_space<vmem>>, vector<8x1xf32>
    tpu.vector_store %arg5[%c0_16, %c0_17], %9 {strides = array<i32>} : memref<8x1xf32, #tpu.memory_space<vmem>>, vector<8x1xf32>,
    %c0_18 = arith.constant 0 : index
    %c0_19 = arith.constant 0 : index
    %32 = vector.load %arg6[%c0_18, %c0_19] : memref<8x1xf32, #tpu.memory_space<vmem>>, vector<8x1xf32>
    tpu.vector_store %arg6[%c0_18, %c0_19], %15 {strides = array<i32>} : memref<8x1xf32, #tpu.memory_space<vmem>>, vector<8x1xf32>,
    return
  }
  func.func @transform_0(%arg0: i32) -> (i32, i32, i32) {
    %c0_i32 = arith.constant 0 : i32
    %c0_i32_0 = arith.constant 0 : i32
    %c0_i32_1 = arith.constant 0 : i32
    return %c0_i32, %arg0, %c0_i32_0 : i32, i32, i32
  }
  func.func @transform_1(%arg0: i32) -> (i32, i32) {
    %c0_i32 = arith.constant 0 : i32
    %c0_i32_0 = arith.constant 0 : i32
    return %arg0, %c0_i32 : i32, i32
  }
  func.func @transform_2(%arg0: i32) -> (i32, i32) {
    %c0_i32 = arith.constant 0 : i32
    %c0_i32_0 = arith.constant 0 : i32
    return %arg0, %c0_i32 : i32, i32
  }
  func.func @transform_3(%arg0: i32) -> (i32, i32, i32) {
    %c0_i32 = arith.constant 0 : i32
    %c0_i32_0 = arith.constant 0 : i32
    %c0_i32_1 = arith.constant 0 : i32
    return %c0_i32, %arg0, %c0_i32_0 : i32, i32, i32
  }
  func.func @transform_4(%arg0: i32) -> (i32, i32) {
    %c0_i32 = arith.constant 0 : i32
    %c0_i32_0 = arith.constant 0 : i32
    return %arg0, %c0_i32 : i32, i32
  }
  func.func @transform_5(%arg0: i32) -> (i32, i32) {
    %c0_i32 = arith.constant 0 : i32
    %c0_i32_0 = arith.constant 0 : i32
    return %arg0, %c0_i32 : i32, i32
  }
}

</mosaic_0001>

<llo_original>
// kernel: meta_batchnorm2d.1
$region0: #{meta_batchnorm2d.1}
  #allocation0 [shape = 'u32[]', space=smem, size = 0x4, offset = 0x4, fixed_abs, tag = 'smem constant byte address 0x4 - core index']
  #allocation1 [shape = 'u32[144,128]{1,0:T(1,128)}', space=vmem, size = 0x12000, scoped, tag = 'internal scratch']
  %s0 = inlined_call_operand.vmem [shape: f32[2,16,256], index: 0, kind: input, shape index: {}]
  %s1 = inlined_call_operand.vmem [shape: f32[16,1], index: 1, kind: input, shape index: {}]
  %s2 = inlined_call_operand.vmem [shape: f32[16,1], index: 2, kind: input, shape index: {}]
  %s3 = inlined_call_operand.vmem [shape: f32[2,16,256], index: 3, kind: output, shape index: {0}]
  %s4 = inlined_call_operand.vmem [shape: f32[16,1], index: 4, kind: output, shape index: {1}]
  %s5 = inlined_call_operand.vmem [shape: f32[16,1], index: 5, kind: output, shape index: {2}]
  %6 = xla_tuple %s3, %s4, %s5
  %s7 = sld [smem:[#allocation0]]
  $region103: #{meta_batchnorm2d.1} parent=0
    _
  %s9 = ssub.s32 1, %s7
  %s10 = scalar_select 0, %s9, %s7
  $region1: #{meta_batchnorm2d.1} parent=0
    #allocation2 [shape = 'u8[32768]{0}', space=vmem, size = 0x8000, scoped, tag = 'input window, operand 0']
    #allocation3 [shape = 'u8[32768]{0}', space=vmem, size = 0x8000, scoped, tag = 'output window, operand 0']
    loop: start=0, step=1, limit=4
    $region2: #{meta_batchnorm2d.1} parent=1 // loop_pre_header
      _
    $region3: #{meta_batchnorm2d.1} parent=1 // loop_header
      %s12 = sphi 0, %s16
      %p13 = scmp.ge.s32.totalorder %s12, 4
      %s22 = sphi 0, %s24
      %s25 = sphi 0, %s22
      %s26 = sphi 0, %s25
      %s42 = sphi 0, %s26
      %s48 = sphi 0, %s50
      %s51 = sphi 0, %s48
      %s52 = sphi 0, %s51
      %s68 = sphi 0, %s52
      %s74 = sphi 0, %s76
      %s77 = sphi 0, %s74
      %s78 = sphi 0, %s77
      %s94 = sphi 0, %s78
      %s100 = sphi 0, %s102
      %s103 = sphi 0, %s100
      %s104 = sphi 0, %s103
      %s120 = sphi 0, %s104
      %s126 = sphi 0, %s128
      %s129 = sphi 0, %s126
      %s130 = sphi 0, %s129
      %s146 = sphi 0, %s130
      %s152 = sphi 0, %s154
      %s155 = sphi 0, %s152
      %s156 = sphi 0, %s155
      %s172 = sphi 0, %s156
    $region4: #{meta_batchnorm2d.1} parent=1 // loop_header_branch
      %15 = sbr.rel (%p13) target = $region8
    $region5: #{meta_batchnorm2d.1} parent=1 // loop_body
      %s17 = ssub.s32 %s12, 1
      %s18 = ssub.s32 %s12, 2
      %s19 = sadd.s32 %s12, 1
      %s20 = ssub.s32 %s12, %s19
      %p21 = scmp.eq.s32.totalorder %s20, 0
      %s23 = sadd.s32 %s22, 1
      %s24 = scalar_select %p21, %s22, %s23
      %p27 = pneg %p21
      %p28 = scmp.eq.s32.totalorder %s12, 1
      %p29 = por %p27, %p28
      %p30 = scmp.ne.s32.totalorder %s22, %s25
      %p31 = scmp.eq.s32.totalorder %s12, 0
      %p32 = por %p30, %p31
      %p33 = scmp.ne.s32.totalorder %s22, %s25
      %p34 = scmp.eq.s32.totalorder %s17, 1
      %p35 = por %p33, %p34
      %p36 = scmp.ne.s32.totalorder %s25, %s26
      %p37 = scmp.eq.s32.totalorder %s17, 0
      %p38 = por %p36, %p37
      %p39 = scmp.ne.s32.totalorder %s25, %s26
      %p40 = scmp.eq.s32.totalorder %s18, 1
      %p41 = por %p39, %p40
      %p43 = scmp.ne.s32.totalorder %s26, %s42
      %p44 = scmp.eq.s32.totalorder %s18, 0
      %p45 = por %p43, %p44
      %s46 = ssub.s32 %s12, %s19
      %p47 = scmp.eq.s32.totalorder %s46, 0
      %s49 = sadd.s32 %s48, 1
      %s50 = scalar_select %p47, %s48, %s49
      %p53 = pneg %p47
      %p54 = scmp.eq.s32.totalorder %s12, 1
      %p55 = por %p53, %p54
      %p56 = scmp.ne.s32.totalorder %s48, %s51
      %p57 = scmp.eq.s32.totalorder %s12, 0
      %p58 = por %p56, %p57
      %p59 = scmp.ne.s32.totalorder %s48, %s51
      %p60 = scmp.eq.s32.totalorder %s17, 1
      %p61 = por %p59, %p60
      %p62 = scmp.ne.s32.totalorder %s51, %s52
      %p63 = scmp.eq.s32.totalorder %s17, 0
      %p64 = por %p62, %p63
      %p65 = scmp.ne.s32.totalorder %s51, %s52
      %p66 = scmp.eq.s32.totalorder %s18, 1
      %p67 = por %p65, %p66
      %p69 = scmp.ne.s32.totalorder %s52, %s68
      %p70 = scmp.eq.s32.totalorder %s18, 0
      %p71 = por %p69, %p70
      %s72 = ssub.s32 %s12, %s19
      %p73 = scmp.eq.s32.totalorder %s72, 0
      %s75 = sadd.s32 %s74, 1
      %s76 = scalar_select %p73, %s74, %s75
      %p79 = pneg %p73
      %p80 = scmp.eq.s32.totalorder %s12, 1
      %p81 = por %p79, %p80
      %p82 = scmp.ne.s32.totalorder %s74, %s77
      %p83 = scmp.eq.s32.totalorder %s12, 0
      %p84 = por %p82, %p83
      %p85 = scmp.ne.s32.totalorder %s74, %s77
      %p86 = scmp.eq.s32.totalorder %s17, 1
      %p87 = por %p85, %p86
      %p88 = scmp.ne.s32.totalorder %s77, %s78
      %p89 = scmp.eq.s32.totalorder %s17, 0
      %p90 = por %p88, %p89
      %p91 = scmp.ne.s32.totalorder %s77, %s78
      %p92 = scmp.eq.s32.totalorder %s18, 1
      %p93 = por %p91, %p92
      %p95 = scmp.ne.s32.totalorder %s78, %s94
      %p96 = scmp.eq.s32.totalorder %s18, 0
      %p97 = por %p95, %p96
      %s98 = ssub.s32 %s12, %s19
      %p99 = scmp.eq.s32.totalorder %s98, 0
      %s101 = sadd.s32 %s100, 1
      %s102 = scalar_select %p99, %s100, %s101
      %p105 = pneg %p99
      %p106 = scmp.eq.s32.totalorder %s12, 1
      %p107 = por %p105, %p106
      %p108 = scmp.ne.s32.totalorder %s100, %s103
      %p109 = scmp.eq.s32.totalorder %s12, 0
      %p110 = por %p108, %p109
      %p111 = scmp.ne.s32.totalorder %s100, %s103
      %p112 = scmp.eq.s32.totalorder %s17, 1
      %p113 = por %p111, %p112
      %p114 = scmp.ne.s32.totalorder %s103, %s104
      %p115 = scmp.eq.s32.totalorder %s17, 0
      %p116 = por %p114, %p115
      %p117 = scmp.ne.s32.totalorder %s103, %s104
      %p118 = scmp.eq.s32.totalorder %s18, 1
      %p119 = por %p117, %p118
      %p121 = scmp.ne.s32.totalorder %s104, %s120
      %p122 = scmp.eq.s32.totalorder %s18, 0
      %p123 = por %p121, %p122
      %s124 = ssub.s32 %s12, %s19
      %p125 = scmp.eq.s32.totalorder %s124, 0
      %s127 = sadd.s32 %s126, 1
      %s128 = scalar_select %p125, %s126, %s127
      %p131 = pneg %p125
      %p132 = scmp.eq.s32.totalorder %s12, 1
      %p133 = por %p131, %p132
      %p134 = scmp.ne.s32.totalorder %s126, %s129
      %p135 = scmp.eq.s32.totalorder %s12, 0
      %p136 = por %p134, %p135
      %p137 = scmp.ne.s32.totalorder %s126, %s129
      %p138 = scmp.eq.s32.totalorder %s17, 1
      %p139 = por %p137, %p138
      %p140 = scmp.ne.s32.totalorder %s129, %s130
      %p141 = scmp.eq.s32.totalorder %s17, 0
      %p142 = por %p140, %p141
      %p143 = scmp.ne.s32.totalorder %s129, %s130
      %p144 = scmp.eq.s32.totalorder %s18, 1
      %p145 = por %p143, %p144
      %p147 = scmp.ne.s32.totalorder %s130, %s146
      %p148 = scmp.eq.s32.totalorder %s18, 0
      %p149 = por %p147, %p148
      %s150 = ssub.s32 %s12, %s19
      %p151 = scmp.eq.s32.totalorder %s150, 0
      %s153 = sadd.s32 %s152, 1
      %s154 = scalar_select %p151, %s152, %s153
      %p157 = pneg %p151
      %p158 = scmp.eq.s32.totalorder %s12, 1
      %p159 = por %p157, %p158
      %p160 = scmp.ne.s32.totalorder %s152, %s155
      %p161 = scmp.eq.s32.totalorder %s12, 0
      %p162 = por %p160, %p161
      %p163 = scmp.ne.s32.totalorder %s152, %s155
      %p164 = scmp.eq.s32.totalorder %s17, 1
      %p165 = por %p163, %p164
      %p166 = scmp.ne.s32.totalorder %s155, %s156
      %p167 = scmp.eq.s32.totalorder %s17, 0
      %p168 = por %p166, %p167
      %p169 = scmp.ne.s32.totalorder %s155, %s156
      %p170 = scmp.eq.s32.totalorder %s18, 1
      %p171 = por %p169, %p170
      %p173 = scmp.ne.s32.totalorder %s156, %s172
      %p174 = scmp.eq.s32.totalorder %s18, 0
      %p175 = por %p173, %p174
      %p176 = scmp.le.s32.totalorder 1, %s12
      %p177 = scmp.lt.s32.totalorder %s12, 3
      %p178 = pnand %p176, %p177
      %p179 = pneg %p178
      // Predicated region
      $region9: #{meta_batchnorm2d.1} parent=5 // pred_check
        _
      $region10: #{meta_batchnorm2d.1} parent=5 // pred_check_branch
        %181 = sbr.rel (%p178) target = $region12
      $region11: #{meta_batchnorm2d.1} parent=5 // pred_region
        %s182 = ssub.s32 %s12, 1
      $region12: #{meta_batchnorm2d.1} parent=5 // pred_fallthru
        _
      %p183 = scmp.lt.s32.totalorder %s12, 2
      // Predicated region
      $region13: #{meta_batchnorm2d.1} parent=5 // pred_check
        %p184 = pneg %p183
      $region14: #{meta_batchnorm2d.1} parent=5 // pred_check_branch
        %186 = sbr.rel (%p184) target = $region16
      $region15: #{meta_batchnorm2d.1} parent=5 // pred_region
        // Predicated region
        $region17: #{meta_batchnorm2d.1} parent=15 // pred_check
          %p187 = pneg %p32
        $region18: #{meta_batchnorm2d.1} parent=15 // pred_check_branch
          %189 = sbr.rel (%p187) target = $region20
        $region19: #{meta_batchnorm2d.1} parent=15 // pred_region
          %s190 = sand.u32 %s22, 1
          %s191 = sand.u32 %s22, 1
          %s192 = smul.addr %s191, 32
          %s193 = scalar_lea.vmem [#allocation2], %s192
          %s194 = smul.addr %s12, 2
          %s195 = smul.addr %s194, 8
          %s196 = scalar_lea.vmem %s0, %s195
          // Predicated region
          $region21: #{meta_batchnorm2d.1} parent=19 // pred_check
            _
          $region22: #{meta_batchnorm2d.1} parent=19 // pred_check_branch
            %198 = sbr.rel (0) target = $region24
          $region23: #{meta_batchnorm2d.1} parent=19 // pred_region
            // Predicated region
            $region25: #{meta_batchnorm2d.1} parent=23 // pred_check
              _
            $region26: #{meta_batchnorm2d.1} parent=23 // pred_check_branch
              %200 = sbr.rel (0) target = $region28
            $region27: #{meta_batchnorm2d.1} parent=23 // pred_region
              loop: start=0, step=1, limit=1
              $region29: #{meta_batchnorm2d.1} parent=27 // loop_pre_header
                _
              $region30: #{meta_batchnorm2d.1} parent=27 // loop_header
                %s202 = sphi 0, %s206
                %p203 = scmp.ge.s32.totalorder %s202, 1
                %s207 = sphi %s196, %s196
                %s208 = sphi %s193, %s193
              $region31: #{meta_batchnorm2d.1} parent=27 // loop_header_branch
                %205 = sbr.rel (%p203) target = $region35
              $region32: #{meta_batchnorm2d.1} parent=27 // loop_body
                %v209 = vld [vmem:[%s207] sm:$0xff]
                %210 = vst [vmem:[%s208] sm:$0xff] %v209
                %v211 = vld [vmem:[%s207 + $0x8] sm:$0xff]
                %212 = vst [vmem:[%s208 + $0x8] sm:$0xff] %v211
                %v213 = vld [vmem:[%s207 + $0x20] sm:$0xff]
                %214 = vst [vmem:[%s208 + $0x10] sm:$0xff] %v213
                %v215 = vld [vmem:[%s207 + $0x28] sm:$0xff]
                %216 = vst [vmem:[%s208 + $0x18] sm:$0xff] %v215
              $region33: #{meta_batchnorm2d.1} parent=27 // loop_footer
                %s206 = sadd.s32 1, %s202
              $region34: #{meta_batchnorm2d.1} parent=27 // loop_footer_branch
                %201 = sbr.rel target = $region30
              $region35: #{meta_batchnorm2d.1} parent=27 // loop_exit
                _
            $region28: #{meta_batchnorm2d.1} parent=23 // pred_fallthru
              _
            // Predicated region
            $region36: #{meta_batchnorm2d.1} parent=23 // pred_check
              _
            $region37: #{meta_batchnorm2d.1} parent=23 // pred_check_branch
              %218 = sbr.rel target = $region39
            $region38: #{meta_batchnorm2d.1} parent=23 // pred_region
              _
            $region39: #{meta_batchnorm2d.1} parent=23 // pred_fallthru
              _
          $region24: #{meta_batchnorm2d.1} parent=19 // pred_fallthru
            _
          %219 = vnop
        $region20: #{meta_batchnorm2d.1} parent=15 // pred_fallthru
          _
        // Predicated region
        $region40: #{meta_batchnorm2d.1} parent=15 // pred_check
          %p220 = pneg %p58
        $region41: #{meta_batchnorm2d.1} parent=15 // pred_check_branch
          %222 = sbr.rel (%p220) target = $region43
        $region42: #{meta_batchnorm2d.1} parent=15 // pred_region
          %p223 = scmp.lt.s32.totalorder %s12, 1
          %s224 = scalar_select %p223, %s12, 1
          %s225 = smul.addr %s224, 8
          %s226 = scalar_lea.vmem %s1, %s225
        $region43: #{meta_batchnorm2d.1} parent=15 // pred_fallthru
          _
        // Predicated region
        $region44: #{meta_batchnorm2d.1} parent=15 // pred_check
          %p227 = pneg %p84
        $region45: #{meta_batchnorm2d.1} parent=15 // pred_check_branch
          %229 = sbr.rel (%p227) target = $region47
        $region46: #{meta_batchnorm2d.1} parent=15 // pred_region
          %p230 = scmp.lt.s32.totalorder %s12, 1
          %s231 = scalar_select %p230, %s12, 1
          %s232 = smul.addr %s231, 8
          %s233 = scalar_lea.vmem %s2, %s232
        $region47: #{meta_batchnorm2d.1} parent=15 // pred_fallthru
          _
      $region16: #{meta_batchnorm2d.1} parent=5 // pred_fallthru
        _
      %p234 = scmp.le.s32.totalorder 1, %s12
      %p235 = scmp.lt.s32.totalorder %s12, 3
      %p236 = pnand %p234, %p235
      %p237 = pneg %p236
      // Predicated region
      $region48: #{meta_batchnorm2d.1} parent=5 // pred_check
        _
      $region49: #{meta_batchnorm2d.1} parent=5 // pred_check_branch
        %239 = sbr.rel (%p236) target = $region51
      $region50: #{meta_batchnorm2d.1} parent=5 // pred_region
        %s240 = ssub.s32 %s12, 1
        %s241 = sand.u32 %s25, 1
        %s242 = sand.u32 %s25, 1
        %s243 = smul.addr %s242, 32
        %s244 = scalar_lea.vmem [#allocation2], %s243
        // Predicated region
        $region52: #{meta_batchnorm2d.1} parent=50 // pred_check
          %p245 = pneg %p38
        $region53: #{meta_batchnorm2d.1} parent=50 // pred_check_branch
          %247 = sbr.rel (%p245) target = $region55
        $region54: #{meta_batchnorm2d.1} parent=50 // pred_region
          _
        $region55: #{meta_batchnorm2d.1} parent=50 // pred_fallthru
          _
        %s248 = sand.u32 %s25, 1
        %s249 = sand.u32 %s25, 1
        %s250 = smul.addr %s249, 32
        %s251 = scalar_lea.vmem [#allocation2], %s250
        %p252 = pneg %p38
        %p253 = pneg %p35
        %p254 = scmp.lt.s32.totalorder %s17, 1
        %s255 = scalar_select %p254, %s17, 1
        %s256 = smul.addr %s255, 8
        %s257 = scalar_lea.vmem %s1, %s256
        %p258 = pneg %p64
        %p259 = pneg %p61
        %p260 = scmp.lt.s32.totalorder %s17, 1
        %s261 = scalar_select %p260, %s17, 1
        %s262 = smul.addr %s261, 8
        %s263 = scalar_lea.vmem %s2, %s262
        %p264 = pneg %p90
        %p265 = pneg %p87
        %p266 = pneg %p116
        %p267 = pneg %p113
        %s268 = sand.u32 %s103, 1
        %s269 = sand.u32 %s103, 1
        %s270 = smul.addr %s269, 32
        %s271 = scalar_lea.vmem [#allocation3], %s270
        %p272 = pneg %p142
        %p273 = pneg %p139
        %p274 = scmp.lt.s32.totalorder %s17, 1
        %s275 = scalar_select %p274, %s17, 1
        %s276 = smul.addr %s275, 8
        %s277 = scalar_lea.vmem %s4, %s276
        %p278 = pneg %p168
        %p279 = pneg %p165
        %p280 = scmp.lt.s32.totalorder %s17, 1
        %s281 = scalar_select %p280, %s17, 1
        %s282 = smul.addr %s281, 8
        %s283 = scalar_lea.vmem %s5, %s282
        %p284 = scmp.lt.s32.totalorder %s17, 1
        %s285 = scalar_select %p284, %s17, 1
        %s286 = smul.addr %s285, 8
        %s287 = scalar_lea.vmem %s1, %s286
        %p288 = scmp.lt.s32.totalorder %s17, 1
        %s289 = scalar_select %p288, %s17, 1
        %s290 = smul.addr %s289, 8
        %s291 = scalar_lea.vmem %s2, %s290
        %p292 = scmp.lt.s32.totalorder %s17, 1
        %s293 = scalar_select %p292, %s17, 1
        %s294 = smul.addr %s293, 8
        %s295 = scalar_lea.vmem %s4, %s294
        %p296 = scmp.lt.s32.totalorder %s17, 1
        %s297 = scalar_select %p296, %s17, 1
        %s298 = smul.addr %s297, 8
        %s299 = scalar_lea.vmem %s5, %s298
        %v300 = vld [vmem:[%s244] sm:$0xff]
        %v301 = vld [vmem:[%s244 + $0x8] sm:$0xff]
        %v302 = vld [vmem:[%s244 + $0x10] sm:$0xff]
        %v303 = vld [vmem:[%s244 + $0x18] sm:$0xff]
        %v304 = vadd.f32 %v300, %v302
        %v305 = vadd.f32 %v301, %v303
        %v306 = vadd.f32 %v304, %v305
        %307 = vadd.xlane.f32.xlu0 %v306
        %v308 = vpop.xlane.xlu0 %307
        %v309 = vmul.f32 %v300, %v300
        %v310 = vmul.f32 %v301, %v301
        %v311 = vmul.f32 %v302, %v302
        %v312 = vmul.f32 %v303, %v303
        %v313 = vadd.f32 %v309, %v311
        %v314 = vadd.f32 %v310, %v312
        %v315 = vadd.f32 %v313, %v314
        %316 = vadd.xlane.f32.xlu0 %v315
        %v317 = vpop.xlane.xlu0 %316
        %v318 = vmul.f32 %v308, 0.001953125
        %v319 = vmul.f32 %v317, 0.001953125
        %v320 = vmul.f32 %v318, %v318
        %v321 = vsub.f32 %v319, %v320
        %v322 = vmax.f32 %v321, 0.0
        %v323 = vadd.f32 %v322, 1e-05
        %v324 = vrsqrt.pop %v323
        %v325 = vld [vmem:[%s287] sm:$0xff]
        %v326 = vmul.f32 %v324, %v325
        %v327 = vld [vmem:[%s291] sm:$0xff]
        %v328 = vmul.f32 %v318, %v326
        %v329 = vsub.f32 %v327, %v328
        %331 = vset.pattern.permute.xlu0 0
        %332 = vperm.xlu0 %331, %v326
        %v333 = vpop.permute.xlu0 %332
        %v335 = vmul.f32 %v300, %v333
        %v336 = vmul.f32 %v301, %v333
        %v337 = vmul.f32 %v302, %v333
        %v338 = vmul.f32 %v303, %v333
        %340 = vset.pattern.permute.xlu0 0
        %341 = vperm.xlu0 %340, %v329
        %v342 = vpop.permute.xlu0 %341
        %v344 = vadd.f32 %v335, %v342
        %v345 = vadd.f32 %v336, %v342
        %v346 = vadd.f32 %v337, %v342
        %v347 = vadd.f32 %v338, %v342
        %348 = vst [vmem:[%s271] sm:$0xff] %v344
        %349 = vst [vmem:[%s271 + $0x8] sm:$0xff] %v345
        %350 = vst [vmem:[%s271 + $0x10] sm:$0xff] %v346
        %351 = vst [vmem:[%s271 + $0x18] sm:$0xff] %v347
        %vm352 = vcmask 7168
        %353 = vst.msk [vmem:[%s295] sm:$0xff] %vm352, %v318
        %354 = vst.msk [vmem:[%s299] sm:$0xff] %vm352, %v322
        %s355 = sand.u32 %s103, 1
        %s356 = sand.u32 %s103, 1
        %s357 = smul.addr %s356, 32
        %s358 = scalar_lea.vmem [#allocation3], %s357
        %p359 = scmp.lt.s32.totalorder %s17, 1
        %s360 = scalar_select %p359, %s17, 1
        %s361 = smul.addr %s360, 8
        %s362 = scalar_lea.vmem %s4, %s361
        %p363 = scmp.lt.s32.totalorder %s17, 1
        %s364 = scalar_select %p363, %s17, 1
        %s365 = smul.addr %s364, 8
        %s366 = scalar_lea.vmem %s5, %s365
        // Predicated region
        $region56: #{meta_batchnorm2d.1} parent=50 // pred_check
          %p367 = pneg %p113
        $region57: #{meta_batchnorm2d.1} parent=50 // pred_check_branch
          %369 = sbr.rel (%p367) target = $region59
        $region58: #{meta_batchnorm2d.1} parent=50 // pred_region
          %s370 = smul.addr %s17, 2
          %s371 = smul.addr %s370, 8
          %s372 = scalar_lea.vmem %s3, %s371
          // Predicated region
          $region60: #{meta_batchnorm2d.1} parent=58 // pred_check
            _
          $region61: #{meta_batchnorm2d.1} parent=58 // pred_check_branch
            %374 = sbr.rel (0) target = $region63
          $region62: #{meta_batchnorm2d.1} parent=58 // pred_region
            // Predicated region
            $region64: #{meta_batchnorm2d.1} parent=62 // pred_check
              _
            $region65: #{meta_batchnorm2d.1} parent=62 // pred_check_branch
              %376 = sbr.rel (0) target = $region67
            $region66: #{meta_batchnorm2d.1} parent=62 // pred_region
              loop: start=0, step=1, limit=1
              $region68: #{meta_batchnorm2d.1} parent=66 // loop_pre_header
                _
              $region69: #{meta_batchnorm2d.1} parent=66 // loop_header
                %s378 = sphi 0, %s382
                %p379 = scmp.ge.s32.totalorder %s378, 1
                %s383 = sphi %s358, %s358
                %s384 = sphi %s372, %s372
              $region70: #{meta_batchnorm2d.1} parent=66 // loop_header_branch
                %381 = sbr.rel (%p379) target = $region74
              $region71: #{meta_batchnorm2d.1} parent=66 // loop_body
                %v385 = vld [vmem:[%s383] sm:$0xff]
                %386 = vst [vmem:[%s384] sm:$0xff] %v385
                %v387 = vld [vmem:[%s383 + $0x8] sm:$0xff]
                %388 = vst [vmem:[%s384 + $0x8] sm:$0xff] %v387
                %v389 = vld [vmem:[%s383 + $0x10] sm:$0xff]
                %390 = vst [vmem:[%s384 + $0x20] sm:$0xff] %v389
                %v391 = vld [vmem:[%s383 + $0x18] sm:$0xff]
                %392 = vst [vmem:[%s384 + $0x28] sm:$0xff] %v391
              $region72: #{meta_batchnorm2d.1} parent=66 // loop_footer
                %s382 = sadd.s32 1, %s378
              $region73: #{meta_batchnorm2d.1} parent=66 // loop_footer_branch
                %377 = sbr.rel target = $region69
              $region74: #{meta_batchnorm2d.1} parent=66 // loop_exit
                _
            $region67: #{meta_batchnorm2d.1} parent=62 // pred_fallthru
              _
            // Predicated region
            $region75: #{meta_batchnorm2d.1} parent=62 // pred_check
              _
            $region76: #{meta_batchnorm2d.1} parent=62 // pred_check_branch
              %394 = sbr.rel target = $region78
            $region77: #{meta_batchnorm2d.1} parent=62 // pred_region
              _
            $region78: #{meta_batchnorm2d.1} parent=62 // pred_fallthru
              _
          $region63: #{meta_batchnorm2d.1} parent=58 // pred_fallthru
            _
          %395 = vnop
        $region59: #{meta_batchnorm2d.1} parent=50 // pred_fallthru
          _
        // Predicated region
        $region79: #{meta_batchnorm2d.1} parent=50 // pred_check
          %p396 = pneg %p139
        $region80: #{meta_batchnorm2d.1} parent=50 // pred_check_branch
          %398 = sbr.rel (%p396) target = $region82
        $region81: #{meta_batchnorm2d.1} parent=50 // pred_region
          _
        $region82: #{meta_batchnorm2d.1} parent=50 // pred_fallthru
          _
        // Predicated region
        $region83: #{meta_batchnorm2d.1} parent=50 // pred_check
          %p399 = pneg %p165
        $region84: #{meta_batchnorm2d.1} parent=50 // pred_check_branch
          %401 = sbr.rel (%p399) target = $region86
        $region85: #{meta_batchnorm2d.1} parent=50 // pred_region
          _
        $region86: #{meta_batchnorm2d.1} parent=50 // pred_fallthru
          _
      $region51: #{meta_batchnorm2d.1} parent=5 // pred_fallthru
        _
      %p402 = scmp.le.s32.totalorder 2, %s12
      // Predicated region
      $region87: #{meta_batchnorm2d.1} parent=5 // pred_check
        %p403 = pneg %p402
      $region88: #{meta_batchnorm2d.1} parent=5 // pred_check_branch
        %405 = sbr.rel (%p403) target = $region90
      $region89: #{meta_batchnorm2d.1} parent=5 // pred_region
        %s406 = ssub.s32 %s12, 2
        // Predicated region
        $region91: #{meta_batchnorm2d.1} parent=89 // pred_check
          %p407 = pneg %p119
        $region92: #{meta_batchnorm2d.1} parent=89 // pred_check_branch
          %409 = sbr.rel (%p407) target = $region94
        $region93: #{meta_batchnorm2d.1} parent=89 // pred_region
          %s410 = sand.u32 %s104, 1
          %s411 = sand.u32 %s104, 1
          %s412 = smul.addr %s411, 32
          %s413 = scalar_lea.vmem [#allocation3], %s412
        $region94: #{meta_batchnorm2d.1} parent=89 // pred_fallthru
          _
        // Predicated region
        $region95: #{meta_batchnorm2d.1} parent=89 // pred_check
          %p414 = pneg %p145
        $region96: #{meta_batchnorm2d.1} parent=89 // pred_check_branch
          %416 = sbr.rel (%p414) target = $region98
        $region97: #{meta_batchnorm2d.1} parent=89 // pred_region
          %p417 = scmp.lt.s32.totalorder %s18, 1
          %s418 = scalar_select %p417, %s18, 1
          %s419 = smul.addr %s418, 8
          %s420 = scalar_lea.vmem %s4, %s419
        $region98: #{meta_batchnorm2d.1} parent=89 // pred_fallthru
          _
        // Predicated region
        $region99: #{meta_batchnorm2d.1} parent=89 // pred_check
          %p421 = pneg %p171
        $region100: #{meta_batchnorm2d.1} parent=89 // pred_check_branch
          %423 = sbr.rel (%p421) target = $region102
        $region101: #{meta_batchnorm2d.1} parent=89 // pred_region
          %p424 = scmp.lt.s32.totalorder %s18, 1
          %s425 = scalar_select %p424, %s18, 1
          %s426 = smul.addr %s425, 8
          %s427 = scalar_lea.vmem %s5, %s426
        $region102: #{meta_batchnorm2d.1} parent=89 // pred_fallthru
          _
      $region90: #{meta_batchnorm2d.1} parent=5 // pred_fallthru
        _
    $region6: #{meta_batchnorm2d.1} parent=1 // loop_footer
      %s16 = sadd.s32 1, %s12
    $region7: #{meta_batchnorm2d.1} parent=1 // loop_footer_branch
      %11 = sbr.rel target = $region3
    $region8: #{meta_batchnorm2d.1} parent=1 // loop_exit
      _

</llo_original>
